<compile_context>
chip_gen: v5e
topology: v5e:2x2
jax: 0.10.0
libtpu: 0.0.40
codegen_flags: <defaults>
</compile_context>

<pallas_src>
import math
import jax
import jax.numpy as jnp
from jax.experimental import pallas as pl
from jax.experimental.pallas import tpu as pltpu


def ffn_kernel(x_ref, w1_ref, b1_ref, w2_ref, b2_ref, gamma_ref, beta_ref,
               o_ref, acc_ref):
    f = pl.program_id(1)

    @pl.when(f == 0)
    def _():
        acc_ref[...] = jnp.zeros_like(acc_ref)

    # linear1 on this F tile (bf16 MXU operands, f32 accumulate) + bias + relu
    xb = x_ref[...].astype(jnp.bfloat16)                       # VPU cast, cheap
    h = jnp.dot(xb, w1_ref[...], preferred_element_type=jnp.float32)
    h = jnp.maximum(h + b1_ref[...], 0.0)                      # (tm, tf) f32

    # linear2 partial product for this F tile, accumulated in f32 scratch
    acc_ref[...] += jnp.dot(h.astype(w2_ref.dtype), w2_ref[...],
                            preferred_element_type=jnp.float32)

    # epilogue: bias2 + residual + LayerNorm (all f32) on the last F tile
    @pl.when(f == pl.num_programs(1) - 1)
    def _():
        t = x_ref[...] + acc_ref[...] + b2_ref[...]            # exact f32 residual
        mean = jnp.mean(t, axis=-1, keepdims=True)
        centered = t - mean
        var = jnp.mean(centered * centered, axis=-1, keepdims=True)
        out = centered * jax.lax.rsqrt(var + 1e-5) * gamma_ref[...] + beta_ref[...]
        o_ref[...] = out.astype(o_ref.dtype)


def ffn_layer(x, w1, b1, w2, b2, gamma, beta, *, tile_m=256, tile_f=512):
    """x: (M, d_model) f32; w1: (d_model, F); w2: (F, d_model); others (1, N)."""
    M, D = x.shape
    F = w1.shape[1]
    assert D % 128 == 0, "d_model should be a multiple of 128 (lane-dense)"
    assert F % 128 == 0, "dim_feedforward should be a multiple of 128"

    tile_f = min(tile_f, F)
    assert F % tile_f == 0, "dim_feedforward must divide by tile_f"

    # MXU-sized row tile; shrink (to a multiple of 8) for tiny inputs.
    tile_m = min(tile_m, ((M + 7) // 8) * 8)
    m_pad = -(-M // tile_m) * tile_m
    if m_pad != M:
        x = jnp.pad(x, ((0, m_pad - M), (0, 0)))

    out_dtype = x.dtype
    # bf16 weights for the MXU; x / biases / LN params stay f32.
    w1b = w1.astype(jnp.bfloat16)
    w2b = w2.astype(jnp.bfloat16)

    grid = (m_pad // tile_m, F // tile_f)

    cost = pl.CostEstimate(
        flops=4 * m_pad * D * F,
        transcendentals=m_pad,  # one rsqrt per row
        bytes_accessed=(x.size * 4 + w1b.size * 2 + w2b.size * 2
                        + m_pad * D * 4),
    )

    out = pl.pallas_call(
        ffn_kernel,
        out_shape=jax.ShapeDtypeStruct((m_pad, D), out_dtype),
        grid_spec=pltpu.PrefetchScalarGridSpec(
            num_scalar_prefetch=0,
            grid=grid,
            in_specs=[
                pl.BlockSpec((tile_m, D), lambda i, f: (i, 0)),    # x tile (f32)
                pl.BlockSpec((D, tile_f), lambda i, f: (0, f)),    # W1 F-tile
                pl.BlockSpec((1, tile_f), lambda i, f: (0, f)),    # b1 F-tile
                pl.BlockSpec((tile_f, D), lambda i, f: (f, 0)),    # W2 F-tile
                pl.BlockSpec((1, D), lambda i, f: (0, 0)),         # b2
                pl.BlockSpec((1, D), lambda i, f: (0, 0)),         # gamma
                pl.BlockSpec((1, D), lambda i, f: (0, 0)),         # beta
            ],
            out_specs=pl.BlockSpec((tile_m, D), lambda i, f: (i, 0)),
            scratch_shapes=[pltpu.VMEM((tile_m, D), jnp.float32)],
        ),
        compiler_params=pltpu.CompilerParams(
            dimension_semantics=("parallel", "arbitrary")),
        cost_estimate=cost,
    )(x, w1b, b1, w2b, b2, gamma, beta)

    return out[:M] if m_pad != M else out


def xavier_uniform(key, fan_out, fan_in, dtype=jnp.float32):
    bound = math.sqrt(6.0 / (fan_in + fan_out))
    # PyTorch weight is (out, in); return transposed to (in, out) for the kernel.
    w = jax.random.uniform(key, (fan_out, fan_in), dtype, -bound, bound)
    return w.T


if __name__ == "__main__":
    # Small, lane-dense demo shapes: (seq, batch, d_model) with d_model=128.
    seq, batch, d_model, dim_ff = 8, 2, 128, 256

    key = jax.random.PRNGKey(0)
    k_x, k_w1, k_b1, k_w2, k_b2 = jax.random.split(key, 5)

    w1 = xavier_uniform(k_w1, dim_ff, d_model)                       # (d_model, F)
    b1 = jax.random.uniform(k_b1, (1, dim_ff), jnp.float32,
                            -1.0 / math.sqrt(d_model), 1.0 / math.sqrt(d_model))
    w2 = xavier_uniform(k_w2, d_model, dim_ff)                       # (F, d_model)
    b2 = jax.random.uniform(k_b2, (1, d_model), jnp.float32,
                            -1.0 / math.sqrt(dim_ff), 1.0 / math.sqrt(dim_ff))
    gamma = jnp.ones((1, d_model), jnp.float32)
    beta = jnp.zeros((1, d_model), jnp.float32)

    tgt = jax.random.normal(k_x, (seq, batch, d_model), jnp.float32)

    # flatten (seq, batch, d_model) -> (M, d_model); Linear/LayerNorm act on
    # the last dim, so this is semantics-preserving.
    x2d = tgt.reshape(seq * batch, d_model)
    # tile_f=128 here to exercise the F-axis accumulation loop (2 steps).
    out2d = ffn_layer(x2d, w1, b1, w2, b2, gamma, beta, tile_f=128)
    out = out2d.reshape(seq, batch, d_model)
    jax.block_until_ready(out)

    # pure-JAX reference mirroring the kernel's bf16-MXU / f32-accumulate math
    # (residual and LayerNorm are exact f32, as in the PyTorch module).
    xb = x2d.astype(jnp.bfloat16)
    h_ref = jnp.maximum(
        jnp.dot(xb, w1.astype(jnp.bfloat16),
                preferred_element_type=jnp.float32) + b1, 0.0)
    y_ref = jnp.dot(h_ref.astype(jnp.bfloat16), w2.astype(jnp.bfloat16),
                    preferred_element_type=jnp.float32) + b2
    t_ref = x2d + y_ref
    mu = jnp.mean(t_ref, axis=-1, keepdims=True)
    var = jnp.mean((t_ref - mu) ** 2, axis=-1, keepdims=True)
    ref = (t_ref - mu) * jax.lax.rsqrt(var + 1e-5) * gamma + beta
    assert jnp.allclose(out2d, ref, atol=1e-3, rtol=1e-3), "mismatch vs reference"

    print("KERNEL_OK")
</pallas_src>

<mosaic_0001>
module attributes {stable_mosaic.version = 11 : i64} {
  func.func @ffn_kernel(%arg0: i32, %arg1: i32, %arg2: memref<16x128xf32, #tpu.memory_space<vmem>>, %arg3: memref<128x128xbf16, #tpu.memory_space<vmem>>, %arg4: memref<1x128xf32, #tpu.memory_space<vmem>>, %arg5: memref<128x128xbf16, #tpu.memory_space<vmem>>, %arg6: memref<1x128xf32, #tpu.memory_space<vmem>>, %arg7: memref<1x128xf32, #tpu.memory_space<vmem>>, %arg8: memref<1x128xf32, #tpu.memory_space<vmem>>, %arg9: memref<16x128xf32, #tpu.memory_space<vmem>>, %arg10: memref<16x128xf32, #tpu.memory_space<vmem>>) attributes {dimension_semantics = [#tpu.dimension_semantics<parallel>, #tpu.dimension_semantics<arbitrary>], iteration_bounds = array<i64: 1, 2>, scalar_prefetch = 0 : i64, scratch_operands = 1 : i64, tpu.core_type = #tpu.core_type<tc>, window_params = [{transform_indices = @transform_0, window_bounds = array<i64: 16, 128>}, {transform_indices = @transform_1, window_bounds = array<i64: 128, 128>}, {transform_indices = @transform_2, window_bounds = array<i64: 1, 128>}, {transform_indices = @transform_3, window_bounds = array<i64: 128, 128>}, {pipeline_mode = #tpu.pipeline_mode<synchronous>, transform_indices = @transform_4, window_bounds = array<i64: 1, 128>}, {pipeline_mode = #tpu.pipeline_mode<synchronous>, transform_indices = @transform_5, window_bounds = array<i64: 1, 128>}, {pipeline_mode = #tpu.pipeline_mode<synchronous>, transform_indices = @transform_6, window_bounds = array<i64: 1, 128>}, {transform_indices = @transform_7, window_bounds = array<i64: 16, 128>}]} {
    %c0_i32 = arith.constant 0 : i32
    %0 = arith.cmpi eq, %arg1, %c0_i32 : i32
    %1 = arith.extui %0 : i1 to i32
    %c0_i32_0 = arith.constant 0 : i32
    %2 = arith.cmpi ne, %1, %c0_i32_0 : i32
    scf.if %2 {
      %cst_15 = arith.constant 0.000000e+00 : f32
      %21 = vector.broadcast %cst_15 : f32 to vector<16x128xf32>
      %c0_16 = arith.constant 0 : index
      %c0_17 = arith.constant 0 : index
      %22 = vector.load %arg10[%c0_16, %c0_17] : memref<16x128xf32, #tpu.memory_space<vmem>>, vector<16x128xf32>
      tpu.vector_store %arg10[%c0_16, %c0_17], %21 {strides = array<i32>} : memref<16x128xf32, #tpu.memory_space<vmem>>, vector<16x128xf32>,
    } else {
    }
    %c0 = arith.constant 0 : index
    %c0_1 = arith.constant 0 : index
    %3 = vector.load %arg2[%c0, %c0_1] : memref<16x128xf32, #tpu.memory_space<vmem>>, vector<16x128xf32>
    %4 = arith.truncf %3 : vector<16x128xf32> to vector<16x128xbf16>
    %c0_2 = arith.constant 0 : index
    %c0_3 = arith.constant 0 : index
    %5 = vector.load %arg3[%c0_2, %c0_3] : memref<128x128xbf16, #tpu.memory_space<vmem>>, vector<128x128xbf16>
    %cst = arith.constant dense<0.000000e+00> : vector<16x128xf32>
    %6 = tpu.matmul %4, %5, %cst {dimension_numbers = #tpu.dot_dimension_numbers<[1], [0], [0], [1], [0, 0, 1, 1], [], []>} : vector<16x128xbf16>, vector<128x128xbf16>, vector<16x128xf32> -> vector<16x128xf32>
    %c0_4 = arith.constant 0 : index
    %c0_5 = arith.constant 0 : index
    %7 = vector.load %arg4[%c0_4, %c0_5] : memref<1x128xf32, #tpu.memory_space<vmem>>, vector<1x128xf32>
    %8 = vector.broadcast %7 : vector<1x128xf32> to vector<16x128xf32>
    %9 = arith.addf %6, %8 : vector<16x128xf32>
    %cst_6 = arith.constant 0.000000e+00 : f32
    %10 = vector.broadcast %cst_6 : f32 to vector<16x128xf32>
    %11 = arith.maximumf %9, %10 : vector<16x128xf32>
    %c0_7 = arith.constant 0 : index
    %c0_8 = arith.constant 0 : index
    %12 = vector.load %arg10[%c0_7, %c0_8] : memref<16x128xf32, #tpu.memory_space<vmem>>, vector<16x128xf32>
    %13 = arith.truncf %11 : vector<16x128xf32> to vector<16x128xbf16>
    %c0_9 = arith.constant 0 : index
    %c0_10 = arith.constant 0 : index
    %14 = vector.load %arg5[%c0_9, %c0_10] : memref<128x128xbf16, #tpu.memory_space<vmem>>, vector<128x128xbf16>
    %cst_11 = arith.constant dense<0.000000e+00> : vector<16x128xf32>
    %15 = tpu.matmul %13, %14, %cst_11 {dimension_numbers = #tpu.dot_dimension_numbers<[1], [0], [0], [1], [0, 0, 1, 1], [], []>} : vector<16x128xbf16>, vector<128x128xbf16>, vector<16x128xf32> -> vector<16x128xf32>
    %16 = arith.addf %12, %15 : vector<16x128xf32>
    %c0_12 = arith.constant 0 : index
    %c0_13 = arith.constant 0 : index
    %17 = vector.load %arg10[%c0_12, %c0_13] : memref<16x128xf32, #tpu.memory_space<vmem>>, vector<16x128xf32>
    tpu.vector_store %arg10[%c0_12, %c0_13], %16 {strides = array<i32>} : memref<16x128xf32, #tpu.memory_space<vmem>>, vector<16x128xf32>,
    %c1_i32 = arith.constant 1 : i32
    %18 = arith.cmpi eq, %arg1, %c1_i32 : i32
    %19 = arith.extui %18 : i1 to i32
    %c0_i32_14 = arith.constant 0 : i32
    %20 = arith.cmpi ne, %19, %c0_i32_14 : i32
    scf.if %20 {
      %c0_15 = arith.constant 0 : index
      %c0_16 = arith.constant 0 : index
      %21 = vector.load %arg2[%c0_15, %c0_16] : memref<16x128xf32, #tpu.memory_space<vmem>>, vector<16x128xf32>
      %c0_17 = arith.constant 0 : index
      %c0_18 = arith.constant 0 : index
      %22 = vector.load %arg10[%c0_17, %c0_18] : memref<16x128xf32, #tpu.memory_space<vmem>>, vector<16x128xf32>
      %23 = arith.addf %21, %22 : vector<16x128xf32>
      %c0_19 = arith.constant 0 : index
      %c0_20 = arith.constant 0 : index
      %24 = vector.load %arg6[%c0_19, %c0_20] : memref<1x128xf32, #tpu.memory_space<vmem>>, vector<1x128xf32>
      %25 = vector.broadcast %24 : vector<1x128xf32> to vector<16x128xf32>
      %26 = arith.addf %23, %25 : vector<16x128xf32>
      %cst_21 = arith.constant dense<0.000000e+00> : vector<16xf32>
      %27 = vector.multi_reduction <add>, %26, %cst_21 [1] : vector<16x128xf32> to vector<16xf32>
      %28 = vector.shape_cast %27 : vector<16xf32> to vector<16x1xf32>
      %cst_22 = arith.constant 1.280000e+02 : f32
      %29 = vector.broadcast %cst_22 : f32 to vector<16x1xf32>
      %30 = arith.divf %28, %29 : vector<16x1xf32>
      %31 = vector.broadcast %30 : vector<16x1xf32> to vector<16x128xf32>
      %32 = arith.subf %26, %31 : vector<16x128xf32>
      %33 = arith.mulf %32, %32 : vector<16x128xf32>
      %cst_23 = arith.constant dense<0.000000e+00> : vector<16xf32>
      %34 = vector.multi_reduction <add>, %33, %cst_23 [1] : vector<16x128xf32> to vector<16xf32>
      %35 = vector.shape_cast %34 : vector<16xf32> to vector<16x1xf32>
      %cst_24 = arith.constant 1.280000e+02 : f32
      %36 = vector.broadcast %cst_24 : f32 to vector<16x1xf32>
      %37 = arith.divf %35, %36 : vector<16x1xf32>
      %cst_25 = arith.constant 9.99999974E-6 : f32
      %38 = vector.broadcast %cst_25 : f32 to vector<16x1xf32>
      %39 = arith.addf %37, %38 : vector<16x1xf32>
      %40 = math.rsqrt %39 : vector<16x1xf32>
      %41 = vector.broadcast %40 : vector<16x1xf32> to vector<16x128xf32>
      %42 = arith.mulf %32, %41 : vector<16x128xf32>
      %c0_26 = arith.constant 0 : index
      %c0_27 = arith.constant 0 : index
      %43 = vector.load %arg7[%c0_26, %c0_27] : memref<1x128xf32, #tpu.memory_space<vmem>>, vector<1x128xf32>
      %44 = vector.broadcast %43 : vector<1x128xf32> to vector<16x128xf32>
      %45 = arith.mulf %42, %44 : vector<16x128xf32>
      %c0_28 = arith.constant 0 : index
      %c0_29 = arith.constant 0 : index
      %46 = vector.load %arg8[%c0_28, %c0_29] : memref<1x128xf32, #tpu.memory_space<vmem>>, vector<1x128xf32>
      %47 = vector.broadcast %46 : vector<1x128xf32> to vector<16x128xf32>
      %48 = arith.addf %45, %47 : vector<16x128xf32>
      %c0_30 = arith.constant 0 : index
      %c0_31 = arith.constant 0 : index
      %49 = vector.load %arg9[%c0_30, %c0_31] : memref<16x128xf32, #tpu.memory_space<vmem>>, vector<16x128xf32>
      tpu.vector_store %arg9[%c0_30, %c0_31], %48 {strides = array<i32>} : memref<16x128xf32, #tpu.memory_space<vmem>>, vector<16x128xf32>,
    } else {
    }
    return
  }
  func.func @transform_0(%arg0: i32, %arg1: i32) -> (i32, i32) {
    %c0_i32 = arith.constant 0 : i32
    %c0_i32_0 = arith.constant 0 : i32
    return %arg0, %c0_i32 : i32, i32
  }
  func.func @transform_1(%arg0: i32, %arg1: i32) -> (i32, i32) {
    %c0_i32 = arith.constant 0 : i32
    %c0_i32_0 = arith.constant 0 : i32
    return %c0_i32, %arg1 : i32, i32
  }
  func.func @transform_2(%arg0: i32, %arg1: i32) -> (i32, i32) {
    %c0_i32 = arith.constant 0 : i32
    %c0_i32_0 = arith.constant 0 : i32
    return %c0_i32, %arg1 : i32, i32
  }
  func.func @transform_3(%arg0: i32, %arg1: i32) -> (i32, i32) {
    %c0_i32 = arith.constant 0 : i32
    %c0_i32_0 = arith.constant 0 : i32
    return %arg1, %c0_i32 : i32, i32
  }
  func.func @transform_4(%arg0: i32, %arg1: i32) -> (i32, i32) {
    %c0_i32 = arith.constant 0 : i32
    %c0_i32_0 = arith.constant 0 : i32
    %c0_i32_1 = arith.constant 0 : i32
    return %c0_i32, %c0_i32_0 : i32, i32
  }
  func.func @transform_5(%arg0: i32, %arg1: i32) -> (i32, i32) {
    %c0_i32 = arith.constant 0 : i32
    %c0_i32_0 = arith.constant 0 : i32
    %c0_i32_1 = arith.constant 0 : i32
    return %c0_i32, %c0_i32_0 : i32, i32
  }
  func.func @transform_6(%arg0: i32, %arg1: i32) -> (i32, i32) {
    %c0_i32 = arith.constant 0 : i32
    %c0_i32_0 = arith.constant 0 : i32
    %c0_i32_1 = arith.constant 0 : i32
    return %c0_i32, %c0_i32_0 : i32, i32
  }
  func.func @transform_7(%arg0: i32, %arg1: i32) -> (i32, i32) {
    %c0_i32 = arith.constant 0 : i32
    %c0_i32_0 = arith.constant 0 : i32
    return %arg0, %c0_i32 : i32, i32
  }
}

</mosaic_0001>

<llo_original>
// kernel: tpu_custom_call.1
$region0: #{tpu_custom_call.1}
  #allocation0 [shape = 'u32[]', space=smem, size = 0x4, offset = 0x4, fixed_abs, tag = 'smem constant byte address 0x4 - core index']
  #allocation1 [shape = 'u32[72,128]{1,0:T(1,128)}', space=vmem, size = 0x9000, scoped, tag = 'internal scratch']
  #allocation2 [shape = 'f32[16,128]{1,0:T(8,128)}', space=vmem, size = 0x2000, scoped, tag = 'scratch operand']
  %s0 = inlined_call_operand.hbm [shape: f32[16,128], index: 0, kind: input, shape index: {}]
  %s1 = inlined_call_operand.hbm [shape: bf16[128,256], index: 1, kind: input, shape index: {}]
  %s2 = inlined_call_operand.hbm [shape: f32[1,256], index: 2, kind: input, shape index: {}]
  %s3 = inlined_call_operand.hbm [shape: bf16[256,128], index: 3, kind: input, shape index: {}]
  %s4 = inlined_call_operand.vmem [shape: f32[1,128], index: 4, kind: input, shape index: {}]
  %s5 = inlined_call_operand.vmem [shape: f32[1,128], index: 5, kind: input, shape index: {}]
  %s6 = inlined_call_operand.vmem [shape: f32[1,128], index: 6, kind: input, shape index: {}]
  %s7 = inlined_call_operand.hbm [shape: f32[16,128], index: 7, kind: output, shape index: {}]
  %s8 = sld [smem:[#allocation0]]
  $region85: #{tpu_custom_call.1} parent=0
    _
  %s10 = ssub.s32 1, %s8
  %s11 = scalar_select 0, %s10, %s8
  $region1: #{tpu_custom_call.1} parent=0
    #allocation3 [shape = 'u8[8192]{0}', space=vmem, size = 0x2000, scoped, tag = 'input window, operand 0, single buffered']
    #allocation4 [shape = 's32[2]{0}', space=sflag, size = 0x8, scoped, tag = 'scoped memory for tpu_custom_call.1']
    #allocation5 [shape = 's32[2]{0}', space=sflag, size = 0x8, scoped, tag = 'scoped memory for tpu_custom_call.1']
    #allocation6 [shape = 'u8[65536]{0}', space=vmem, size = 0x10000, scoped, tag = 'input window, operand 1']
    #allocation7 [shape = 's32[2]{0}', space=sflag, size = 0x8, scoped, tag = 'scoped memory for tpu_custom_call.1']
    #allocation8 [shape = 'u8[1024]{0}', space=vmem, size = 0x400, scoped, tag = 'input window, operand 2']
    #allocation9 [shape = 'u8[65536]{0}', space=vmem, size = 0x10000, scoped, tag = 'input window, operand 3']
    #allocation10 [shape = 's32[2]{0}', space=sflag, size = 0x8, scoped, tag = 'scoped memory for tpu_custom_call.1']
    #allocation11 [shape = 'u8[8192]{0}', space=vmem, size = 0x2000, scoped, tag = 'output window, operand 0, single buffered']
    %12 = vsyncpa [#allocation4], 0
    %13 = vsyncpa [#allocation7], 0
    %s14 = scalar_lea.sflag [#allocation7], 1
    %15 = vsyncpa %s14, 0
    %16 = vsyncpa [#allocation10], 0
    %s17 = scalar_lea.sflag [#allocation10], 1
    %18 = vsyncpa %s17, 0
    %19 = vsyncpa [#allocation5], 0
    loop: start=0, step=1, limit=4
    $region2: #{tpu_custom_call.1} parent=1 // loop_pre_header
      _
    $region3: #{tpu_custom_call.1} parent=1 // loop_header
      %s21 = sphi 0, %s25
      %p22 = scmp.ge.s32.totalorder %s21, 4
      %s28 = sphi 0, %s40
      %s29 = sphi 0, %s36
      %s30 = sphi 0, %s28
      %s31 = sphi 0, %s29
      %s32 = sphi 0, %s30
      %s33 = sphi 0, %s31
      %s43 = sphi 0, %s45
      %s46 = sphi 0, %s43
      %s47 = sphi 0, %s46
      %s63 = sphi 0, %s47
      %s69 = sphi 0, %s71
      %s72 = sphi 0, %s69
      %s73 = sphi 0, %s72
      %s89 = sphi 0, %s73
      %s95 = sphi 0, %s97
      %s98 = sphi 0, %s95
      %s99 = sphi 0, %s98
      %s115 = sphi 0, %s99
      %s121 = sphi 0, %s123
      %s124 = sphi 0, %s121
      %s125 = sphi 0, %s124
      %s141 = sphi 0, %s125
      %s145 = sphi 0, %s145
      %s147 = sphi 0, %s145
      %s148 = sphi 0, %s147
      %s162 = sphi 0, %s148
      %s166 = sphi 0, %s166
      %s168 = sphi 0, %s166
      %s169 = sphi 0, %s168
      %s183 = sphi 0, %s169
      %s187 = sphi 0, %s187
      %s189 = sphi 0, %s187
      %s190 = sphi 0, %s189
      %s204 = sphi 0, %s190
      %s210 = sphi 0, %s212
      %s213 = sphi 0, %s210
      %s214 = sphi 0, %s213
      %s230 = sphi 0, %s214
    $region4: #{tpu_custom_call.1} parent=1 // loop_header_branch
      %24 = sbr.rel (%p22) target = $region8
    $region5: #{tpu_custom_call.1} parent=1 // loop_body
      %s26 = ssub.s32 %s21, 1
      %s27 = ssub.s32 %s21, 2
      %s34 = sadd.s32 1, %s29
      %p35 = scmp.ge.s32.totalorder %s34, 2
      %s36 = scalar_select %p35, 0, %s34
      %s37 = sadd.s32 1, %s28
      %s38 = scalar_select %p35, %s37, %s28
      %p39 = scmp.ge.s32.totalorder %s38, 1
      %s40 = scalar_select %p39, 0, %s38
      %s41 = ssub.s32 %s28, %s40
      %p42 = scmp.eq.s32.totalorder %s41, 0
      %s44 = sadd.s32 %s43, 1
      %s45 = scalar_select %p42, %s43, %s44
      %p48 = pneg %p42
      %p49 = scmp.eq.s32.totalorder %s21, 1
      %p50 = por %p48, %p49
      %p51 = scmp.ne.s32.totalorder %s43, %s46
      %p52 = scmp.eq.s32.totalorder %s21, 0
      %p53 = por %p51, %p52
      %p54 = scmp.ne.s32.totalorder %s43, %s46
      %p55 = scmp.eq.s32.totalorder %s26, 1
      %p56 = por %p54, %p55
      %p57 = scmp.ne.s32.totalorder %s46, %s47
      %p58 = scmp.eq.s32.totalorder %s26, 0
      %p59 = por %p57, %p58
      %p60 = scmp.ne.s32.totalorder %s46, %s47
      %p61 = scmp.eq.s32.totalorder %s27, 1
      %p62 = por %p60, %p61
      %p64 = scmp.ne.s32.totalorder %s47, %s63
      %p65 = scmp.eq.s32.totalorder %s27, 0
      %p66 = por %p64, %p65
      %s67 = ssub.s32 %s29, %s36
      %p68 = scmp.eq.s32.totalorder %s67, 0
      %s70 = sadd.s32 %s69, 1
      %s71 = scalar_select %p68, %s69, %s70
      %p74 = pneg %p68
      %p75 = scmp.eq.s32.totalorder %s21, 1
      %p76 = por %p74, %p75
      %p77 = scmp.ne.s32.totalorder %s69, %s72
      %p78 = scmp.eq.s32.totalorder %s21, 0
      %p79 = por %p77, %p78
      %p80 = scmp.ne.s32.totalorder %s69, %s72
      %p81 = scmp.eq.s32.totalorder %s26, 1
      %p82 = por %p80, %p81
      %p83 = scmp.ne.s32.totalorder %s72, %s73
      %p84 = scmp.eq.s32.totalorder %s26, 0
      %p85 = por %p83, %p84
      %p86 = scmp.ne.s32.totalorder %s72, %s73
      %p87 = scmp.eq.s32.totalorder %s27, 1
      %p88 = por %p86, %p87
      %p90 = scmp.ne.s32.totalorder %s73, %s89
      %p91 = scmp.eq.s32.totalorder %s27, 0
      %p92 = por %p90, %p91
      %s93 = ssub.s32 %s29, %s36
      %p94 = scmp.eq.s32.totalorder %s93, 0
      %s96 = sadd.s32 %s95, 1
      %s97 = scalar_select %p94, %s95, %s96
      %p100 = pneg %p94
      %p101 = scmp.eq.s32.totalorder %s21, 1
      %p102 = por %p100, %p101
      %p103 = scmp.ne.s32.totalorder %s95, %s98
      %p104 = scmp.eq.s32.totalorder %s21, 0
      %p105 = por %p103, %p104
      %p106 = scmp.ne.s32.totalorder %s95, %s98
      %p107 = scmp.eq.s32.totalorder %s26, 1
      %p108 = por %p106, %p107
      %p109 = scmp.ne.s32.totalorder %s98, %s99
      %p110 = scmp.eq.s32.totalorder %s26, 0
      %p111 = por %p109, %p110
      %p112 = scmp.ne.s32.totalorder %s98, %s99
      %p113 = scmp.eq.s32.totalorder %s27, 1
      %p114 = por %p112, %p113
      %p116 = scmp.ne.s32.totalorder %s99, %s115
      %p117 = scmp.eq.s32.totalorder %s27, 0
      %p118 = por %p116, %p117
      %s119 = ssub.s32 %s29, %s36
      %p120 = scmp.eq.s32.totalorder %s119, 0
      %s122 = sadd.s32 %s121, 1
      %s123 = scalar_select %p120, %s121, %s122
      %p126 = pneg %p120
      %p127 = scmp.eq.s32.totalorder %s21, 1
      %p128 = por %p126, %p127
      %p129 = scmp.ne.s32.totalorder %s121, %s124
      %p130 = scmp.eq.s32.totalorder %s21, 0
      %p131 = por %p129, %p130
      %p132 = scmp.ne.s32.totalorder %s121, %s124
      %p133 = scmp.eq.s32.totalorder %s26, 1
      %p134 = por %p132, %p133
      %p135 = scmp.ne.s32.totalorder %s124, %s125
      %p136 = scmp.eq.s32.totalorder %s26, 0
      %p137 = por %p135, %p136
      %p138 = scmp.ne.s32.totalorder %s124, %s125
      %p139 = scmp.eq.s32.totalorder %s27, 1
      %p140 = por %p138, %p139
      %p142 = scmp.ne.s32.totalorder %s125, %s141
      %p143 = scmp.eq.s32.totalorder %s27, 0
      %p144 = por %p142, %p143
      %s146 = sadd.s32 %s145, 1
      %p149 = scmp.eq.s32.totalorder %s21, 1
      %p150 = scmp.ne.s32.totalorder %s145, %s147
      %p151 = scmp.eq.s32.totalorder %s21, 0
      %p152 = por %p150, %p151
      %p153 = scmp.ne.s32.totalorder %s145, %s147
      %p154 = scmp.eq.s32.totalorder %s26, 1
      %p155 = por %p153, %p154
      %p156 = scmp.ne.s32.totalorder %s147, %s148
      %p157 = scmp.eq.s32.totalorder %s26, 0
      %p158 = por %p156, %p157
      %p159 = scmp.ne.s32.totalorder %s147, %s148
      %p160 = scmp.eq.s32.totalorder %s27, 1
      %p161 = por %p159, %p160
      %p163 = scmp.ne.s32.totalorder %s148, %s162
      %p164 = scmp.eq.s32.totalorder %s27, 0
      %p165 = por %p163, %p164
      %s167 = sadd.s32 %s166, 1
      %p170 = scmp.eq.s32.totalorder %s21, 1
      %p171 = scmp.ne.s32.totalorder %s166, %s168
      %p172 = scmp.eq.s32.totalorder %s21, 0
      %p173 = por %p171, %p172
      %p174 = scmp.ne.s32.totalorder %s166, %s168
      %p175 = scmp.eq.s32.totalorder %s26, 1
      %p176 = por %p174, %p175
      %p177 = scmp.ne.s32.totalorder %s168, %s169
      %p178 = scmp.eq.s32.totalorder %s26, 0
      %p179 = por %p177, %p178
      %p180 = scmp.ne.s32.totalorder %s168, %s169
      %p181 = scmp.eq.s32.totalorder %s27, 1
      %p182 = por %p180, %p181
      %p184 = scmp.ne.s32.totalorder %s169, %s183
      %p185 = scmp.eq.s32.totalorder %s27, 0
      %p186 = por %p184, %p185
      %s188 = sadd.s32 %s187, 1
      %p191 = scmp.eq.s32.totalorder %s21, 1
      %p192 = scmp.ne.s32.totalorder %s187, %s189
      %p193 = scmp.eq.s32.totalorder %s21, 0
      %p194 = por %p192, %p193
      %p195 = scmp.ne.s32.totalorder %s187, %s189
      %p196 = scmp.eq.s32.totalorder %s26, 1
      %p197 = por %p195, %p196
      %p198 = scmp.ne.s32.totalorder %s189, %s190
      %p199 = scmp.eq.s32.totalorder %s26, 0
      %p200 = por %p198, %p199
      %p201 = scmp.ne.s32.totalorder %s189, %s190
      %p202 = scmp.eq.s32.totalorder %s27, 1
      %p203 = por %p201, %p202
      %p205 = scmp.ne.s32.totalorder %s190, %s204
      %p206 = scmp.eq.s32.totalorder %s27, 0
      %p207 = por %p205, %p206
      %s208 = ssub.s32 %s28, %s40
      %p209 = scmp.eq.s32.totalorder %s208, 0
      %s211 = sadd.s32 %s210, 1
      %s212 = scalar_select %p209, %s210, %s211
      %p215 = pneg %p209
      %p216 = scmp.eq.s32.totalorder %s21, 1
      %p217 = por %p215, %p216
      %p218 = scmp.ne.s32.totalorder %s210, %s213
      %p219 = scmp.eq.s32.totalorder %s21, 0
      %p220 = por %p218, %p219
      %p221 = scmp.ne.s32.totalorder %s210, %s213
      %p222 = scmp.eq.s32.totalorder %s26, 1
      %p223 = por %p221, %p222
      %p224 = scmp.ne.s32.totalorder %s213, %s214
      %p225 = scmp.eq.s32.totalorder %s26, 0
      %p226 = por %p224, %p225
      %p227 = scmp.ne.s32.totalorder %s213, %s214
      %p228 = scmp.eq.s32.totalorder %s27, 1
      %p229 = por %p227, %p228
      %p231 = scmp.ne.s32.totalorder %s214, %s230
      %p232 = scmp.eq.s32.totalorder %s27, 0
      %p233 = por %p231, %p232
      %p234 = scmp.le.s32.totalorder 1, %s21
      %p235 = scmp.lt.s32.totalorder %s21, 3
      %p236 = pnand %p234, %p235
      %p237 = pneg %p236
      // Predicated region
      $region9: #{tpu_custom_call.1} parent=5 // pred_check
        _
      $region10: #{tpu_custom_call.1} parent=5 // pred_check_branch
        %239 = sbr.rel (%p236) target = $region12
      $region11: #{tpu_custom_call.1} parent=5 // pred_region
        %s240 = ssub.s32 %s21, 1
        // Predicated region
        $region13: #{tpu_custom_call.1} parent=11 // pred_check
          %p241 = pneg %p59
        $region14: #{tpu_custom_call.1} parent=11 // pred_check_branch
          %243 = sbr.rel (%p241) target = $region16
        $region15: #{tpu_custom_call.1} parent=11 // pred_region
          %s244 = smul.u32 2, %s30
          %246 = vsyncadd [#allocation4], 0
          %s247 = smul.addr %s244, 8
          %s248 = scalar_lea.hbm %s0, %s247
          %s249 = sshll.u32 %s248, 4
          %s250 = int_to_ptr.hbm [resolvable:$true] %s249
          %s251 = sshll.u32 [#allocation3], 4
          %s252 = int_to_ptr.vmem [resolvable:$true] %s251
          %257 = dma.hbm_to_vmem [thread:$0]  %s250, 256, %s252, [#allocation4], 128, 128, 8
        $region16: #{tpu_custom_call.1} parent=11 // pred_fallthru
          _
        // Predicated region
        $region17: #{tpu_custom_call.1} parent=11 // pred_check
          %p258 = pneg %p158
        $region18: #{tpu_custom_call.1} parent=11 // pred_check_branch
          %260 = sbr.rel (%p258) target = $region20
        $region19: #{tpu_custom_call.1} parent=11 // pred_region
          _
        $region20: #{tpu_custom_call.1} parent=11 // pred_fallthru
          _
        // Predicated region
        $region21: #{tpu_custom_call.1} parent=11 // pred_check
          %p261 = pneg %p179
        $region22: #{tpu_custom_call.1} parent=11 // pred_check_branch
          %263 = sbr.rel (%p261) target = $region24
        $region23: #{tpu_custom_call.1} parent=11 // pred_region
          _
        $region24: #{tpu_custom_call.1} parent=11 // pred_fallthru
          _
        // Predicated region
        $region25: #{tpu_custom_call.1} parent=11 // pred_check
          %p264 = pneg %p200
        $region26: #{tpu_custom_call.1} parent=11 // pred_check_branch
          %266 = sbr.rel (%p264) target = $region28
        $region27: #{tpu_custom_call.1} parent=11 // pred_region
          _
        $region28: #{tpu_custom_call.1} parent=11 // pred_fallthru
          _
      $region12: #{tpu_custom_call.1} parent=5 // pred_fallthru
        _
      %p267 = scmp.lt.s32.totalorder %s21, 2
      // Predicated region
      $region29: #{tpu_custom_call.1} parent=5 // pred_check
        %p268 = pneg %p267
      $region30: #{tpu_custom_call.1} parent=5 // pred_check_branch
        %270 = sbr.rel (%p268) target = $region32
      $region31: #{tpu_custom_call.1} parent=5 // pred_region
        // Predicated region
        $region33: #{tpu_custom_call.1} parent=31 // pred_check
          %p271 = pneg %p79
        $region34: #{tpu_custom_call.1} parent=31 // pred_check_branch
          %273 = sbr.rel (%p271) target = $region36
        $region35: #{tpu_custom_call.1} parent=31 // pred_region
          %s274 = sand.u32 %s21, 1
          %s275 = scalar_lea.sflag [#allocation7], %s274
          %s276 = sand.u32 %s69, 1
          %s277 = smul.addr %s276, 64
          %s278 = scalar_lea.vmem [#allocation6], %s277
          %280 = vsyncadd %s275, 0
          %s281 = smul.addr %s29, 4
          %s282 = scalar_lea.hbm %s1, %s281
          %s283 = sshll.u32 %s282, 4
          %s284 = int_to_ptr.hbm [resolvable:$true] %s283
          %s285 = sshll.u32 %s278, 4
          %s286 = int_to_ptr.vmem [resolvable:$true] %s285
          %291 = dma.hbm_to_vmem [thread:$0]  %s284, 1024, %s286, %s275, 128, 64, 4
        $region36: #{tpu_custom_call.1} parent=31 // pred_fallthru
          _
        // Predicated region
        $region37: #{tpu_custom_call.1} parent=31 // pred_check
          %p292 = pneg %p105
        $region38: #{tpu_custom_call.1} parent=31 // pred_check_branch
          %294 = sbr.rel (%p292) target = $region40
        $region39: #{tpu_custom_call.1} parent=31 // pred_region
          %s295 = sand.u32 %s21, 1
          %s296 = scalar_lea.sflag [#allocation7], %s295
          %s297 = sand.u32 %s95, 1
          %s298 = scalar_lea.vmem [#allocation8], %s297
          %300 = vsyncadd %s296, 0
          %s301 = scalar_lea.hbm %s2, %s29
          %s303 = sshll.u32 %s301, 4
          %s304 = int_to_ptr.hbm [resolvable:$true] %s303
          %s305 = sshll.u32 %s298, 4
          %s306 = int_to_ptr.vmem [resolvable:$true] %s305
          %308 = dma.hbm_to_vmem [thread:$0]  %s304, 16, %s306, %s296
        $region40: #{tpu_custom_call.1} parent=31 // pred_fallthru
          _
        // Predicated region
        $region41: #{tpu_custom_call.1} parent=31 // pred_check
          %p309 = pneg %p131
        $region42: #{tpu_custom_call.1} parent=31 // pred_check_branch
          %311 = sbr.rel (%p309) target = $region44
        $region43: #{tpu_custom_call.1} parent=31 // pred_region
          %s312 = sand.u32 %s121, 1
          %s313 = scalar_lea.sflag [#allocation10], %s312
          %s314 = sand.u32 %s121, 1
          %s315 = smul.addr %s314, 64
          %s316 = scalar_lea.vmem [#allocation9], %s315
          %s317 = smul.u32 16, %s29
          %319 = vsyncadd %s313, 0
          %s320 = smul.addr %s317, 4
          %s321 = scalar_lea.hbm %s3, %s320
          %s322 = sshll.u32 %s321, 4
          %s323 = int_to_ptr.hbm [resolvable:$true] %s322
          %s324 = sshll.u32 %s316, 4
          %s325 = int_to_ptr.vmem [resolvable:$true] %s324
          %330 = dma.hbm_to_vmem [thread:$0]  %s323, 1024, %s325, %s313, 64, 64, 4
        $region44: #{tpu_custom_call.1} parent=31 // pred_fallthru
          _
      $region32: #{tpu_custom_call.1} parent=5 // pred_fallthru
        _
      %p331 = scmp.le.s32.totalorder 1, %s21
      %p332 = scmp.lt.s32.totalorder %s21, 3
      %p333 = pnand %p331, %p332
      %p334 = pneg %p333
      // Predicated region
      $region45: #{tpu_custom_call.1} parent=5 // pred_check
        _
      $region46: #{tpu_custom_call.1} parent=5 // pred_check_branch
        %336 = sbr.rel (%p333) target = $region48
      $region47: #{tpu_custom_call.1} parent=5 // pred_region
        %s337 = ssub.s32 %s21, 1
        // Predicated region
        $region49: #{tpu_custom_call.1} parent=47 // pred_check
          %p338 = pneg %p59
        $region50: #{tpu_custom_call.1} parent=47 // pred_check_branch
          %340 = sbr.rel (%p338) target = $region52
        $region51: #{tpu_custom_call.1} parent=47 // pred_region
          %342 = dma.done [#allocation4], 256
        $region52: #{tpu_custom_call.1} parent=47 // pred_fallthru
          _
        %s343 = sand.u32 %s26, 1
        %s344 = scalar_lea.sflag [#allocation7], %s343
        %s345 = sand.u32 %s72, 1
        %s346 = smul.addr %s345, 64
        %s347 = scalar_lea.vmem [#allocation6], %s346
        // Predicated region
        $region53: #{tpu_custom_call.1} parent=47 // pred_check
          %p348 = pneg %p85
        $region54: #{tpu_custom_call.1} parent=47 // pred_check_branch
          %350 = sbr.rel (%p348) target = $region56
        $region55: #{tpu_custom_call.1} parent=47 // pred_region
          %352 = dma.done %s344, 1024
        $region56: #{tpu_custom_call.1} parent=47 // pred_fallthru
          _
        %s353 = sand.u32 %s26, 1
        %s354 = scalar_lea.sflag [#allocation7], %s353
        %s355 = sand.u32 %s98, 1
        %s356 = scalar_lea.vmem [#allocation8], %s355
        // Predicated region
        $region57: #{tpu_custom_call.1} parent=47 // pred_check
          %p357 = pneg %p111
        $region58: #{tpu_custom_call.1} parent=47 // pred_check_branch
          %359 = sbr.rel (%p357) target = $region60
        $region59: #{tpu_custom_call.1} parent=47 // pred_region
          %361 = dma.done %s354, 16
        $region60: #{tpu_custom_call.1} parent=47 // pred_fallthru
          _
        %s362 = sand.u32 %s124, 1
        %s363 = scalar_lea.sflag [#allocation10], %s362
        %s364 = sand.u32 %s124, 1
        %s365 = smul.addr %s364, 64
        %s366 = scalar_lea.vmem [#allocation9], %s365
        // Predicated region
        $region61: #{tpu_custom_call.1} parent=47 // pred_check
          %p367 = pneg %p137
        $region62: #{tpu_custom_call.1} parent=47 // pred_check_branch
          %369 = sbr.rel (%p367) target = $region64
        $region63: #{tpu_custom_call.1} parent=47 // pred_region
          %371 = dma.done %s363, 1024
        $region64: #{tpu_custom_call.1} parent=47 // pred_fallthru
          _
        %p372 = pneg %p59
        %p373 = pneg %p56
        %s374 = sand.u32 %s26, 1
        %s375 = scalar_lea.sflag [#allocation7], %s374
        %s376 = sand.u32 %s72, 1
        %s377 = smul.addr %s376, 64
        %s378 = scalar_lea.vmem [#allocation6], %s377
        %p379 = pneg %p85
        %p380 = pneg %p82
        %s381 = sand.u32 %s26, 1
        %s382 = scalar_lea.sflag [#allocation7], %s381
        %s383 = sand.u32 %s98, 1
        %s384 = scalar_lea.vmem [#allocation8], %s383
        %p385 = pneg %p111
        %p386 = pneg %p108
        %s387 = sand.u32 %s124, 1
        %s388 = scalar_lea.sflag [#allocation10], %s387
        %s389 = sand.u32 %s124, 1
        %s390 = smul.addr %s389, 64
        %s391 = scalar_lea.vmem [#allocation9], %s390
        %p392 = pneg %p137
        %p393 = pneg %p134
        %p394 = pneg %p158
        %p395 = pneg %p155
        %p396 = pneg %p179
        %p397 = pneg %p176
        %p398 = pneg %p200
        %p399 = pneg %p197
        %p400 = pneg %p226
        %p401 = pneg %p223
        %s402 = smul.u32 2, %s30
        %s403 = smul.u32 16, %s31
        %s404 = smul.u32 2, %s30
        %p405 = scmp.eq.s32.totalorder %s31, 0
        // Predicated region
        $region65: #{tpu_custom_call.1} parent=47 // pred_check
          %p406 = pneg %p405
        $region66: #{tpu_custom_call.1} parent=47 // pred_check_branch
          %408 = sbr.rel (%p406) target = $region68
        $region67: #{tpu_custom_call.1} parent=47 // pred_region
          %409 = vst [vmem:[#allocation2] sm:$0xff] 0.0
          %410 = vst [vmem:[#allocation2 + $0x8] sm:$0xff] 0.0
        $region68: #{tpu_custom_call.1} parent=47 // pred_fallthru
          _
        %v411 = vld [vmem:[#allocation3] sm:$0xff]
        %v412 = vld [vmem:[#allocation3 + $0x8] sm:$0xff]
        %v413 = vpack.c.bf16 %v412, %v411
        %v414 = vld [vmem:[%s347] sm:$0xf]
        %v415 = vld [vmem:[%s347 + $0x4] sm:$0xf]
        %v416 = vld [vmem:[%s347 + $0x8] sm:$0xf]
        %v417 = vld [vmem:[%s347 + $0xc] sm:$0xf]
        %v418 = vld [vmem:[%s347 + $0x10] sm:$0xf]
        %v419 = vld [vmem:[%s347 + $0x14] sm:$0xf]
        %v420 = vld [vmem:[%s347 + $0x18] sm:$0xf]
        %v421 = vld [vmem:[%s347 + $0x1c] sm:$0xf]
        %v422 = vld [vmem:[%s347 + $0x20] sm:$0xf]
        %v423 = vld [vmem:[%s347 + $0x24] sm:$0xf]
        %v424 = vld [vmem:[%s347 + $0x28] sm:$0xf]
        %v425 = vld [vmem:[%s347 + $0x2c] sm:$0xf]
        %v426 = vld [vmem:[%s347 + $0x30] sm:$0xf]
        %v427 = vld [vmem:[%s347 + $0x34] sm:$0xf]
        %v428 = vld [vmem:[%s347 + $0x38] sm:$0xf]
        %v429 = vld [vmem:[%s347 + $0x3c] sm:$0xf]
        %v430 = vld [vmem:[%s356] sm:$0x1]
        %v432 = vperm.slane %v430, 0
        %v450 = vunpack.c.l.b16 %v414
        %v451 = vunpack.c.l.b16 %v415
        %v452 = vunpack.c.l.b16 %v416
        %v453 = vunpack.c.l.b16 %v417
        %v454 = vunpack.c.l.b16 %v418
        %v455 = vunpack.c.l.b16 %v419
        %v456 = vunpack.c.l.b16 %v420
        %v457 = vunpack.c.l.b16 %v421
        %v458 = vunpack.c.l.b16 %v422
        %v459 = vunpack.c.l.b16 %v423
        %v460 = vunpack.c.l.b16 %v424
        %v461 = vunpack.c.l.b16 %v425
        %v462 = vunpack.c.l.b16 %v426
        %v463 = vunpack.c.l.b16 %v427
        %v464 = vunpack.c.l.b16 %v428
        %v465 = vunpack.c.l.b16 %v429
        %v466 = vpack.c.b16 %v451, %v450
        %v467 = vpack.c.b16 %v453, %v452
        %v468 = vpack.c.b16 %v455, %v454
        %v469 = vpack.c.b16 %v457, %v456
        %v470 = vpack.c.b16 %v459, %v458
        %v471 = vpack.c.b16 %v461, %v460
        %v472 = vpack.c.b16 %v463, %v462
        %v473 = vpack.c.b16 %v465, %v464
        %482 = vmatpush.bf16.msra.mxu0 %v473
        %483 = vmatpush.bf16.msra.mxu0 %v472
        %484 = vmatpush.bf16.msra.mxu0 %v471
        %485 = vmatpush.bf16.msra.mxu0 %v470
        %486 = vmatpush.bf16.msra.mxu0 %v469
        %487 = vmatpush.bf16.msra.mxu0 %v468
        %488 = vmatpush.bf16.msra.mxu0 %v467
        %489 = vmatpush.bf16.msra.mxu0 %v466
        %490 = vmatmul.bf16.gmra.mxu0 %v413
        %v491 = vpop.f32.mrf.mxu0
        %v492 = vadd.f32 %v432, %v491
        %v493 = vpop.f32.mrf.mxu0
        %v494 = vadd.f32 %v432, %v493
        %495 = vdwg.mxu0
        %v496 = vmax.f32 %v492, 0.0
        %v497 = vmax.f32 %v494, 0.0
        %v498 = vld [vmem:[#allocation2] sm:$0xff]
        %v499 = vld [vmem:[#allocation2 + $0x8] sm:$0xff]
        %v500 = vpack.c.bf16 %v497, %v496
        %v501 = vld [vmem:[%s366] sm:$0xf]
        %v502 = vld [vmem:[%s366 + $0x4] sm:$0xf]
        %v503 = vld [vmem:[%s366 + $0x8] sm:$0xf]
        %v504 = vld [vmem:[%s366 + $0xc] sm:$0xf]
        %v505 = vld [vmem:[%s366 + $0x10] sm:$0xf]
        %v506 = vld [vmem:[%s366 + $0x14] sm:$0xf]
        %v507 = vld [vmem:[%s366 + $0x18] sm:$0xf]
        %v508 = vld [vmem:[%s366 + $0x1c] sm:$0xf]
        %v509 = vld [vmem:[%s366 + $0x20] sm:$0xf]
        %v510 = vld [vmem:[%s366 + $0x24] sm:$0xf]
        %v511 = vld [vmem:[%s366 + $0x28] sm:$0xf]
        %v512 = vld [vmem:[%s366 + $0x2c] sm:$0xf]
        %v513 = vld [vmem:[%s366 + $0x30] sm:$0xf]
        %v514 = vld [vmem:[%s366 + $0x34] sm:$0xf]
        %v515 = vld [vmem:[%s366 + $0x38] sm:$0xf]
        %v516 = vld [vmem:[%s366 + $0x3c] sm:$0xf]
        %v533 = vunpack.c.l.b16 %v501
        %v534 = vunpack.c.l.b16 %v502
        %v535 = vunpack.c.l.b16 %v503
        %v536 = vunpack.c.l.b16 %v504
        %v537 = vunpack.c.l.b16 %v505
        %v538 = vunpack.c.l.b16 %v506
        %v539 = vunpack.c.l.b16 %v507
        %v540 = vunpack.c.l.b16 %v508
        %v541 = vunpack.c.l.b16 %v509
        %v542 = vunpack.c.l.b16 %v510
        %v543 = vunpack.c.l.b16 %v511
        %v544 = vunpack.c.l.b16 %v512
        %v545 = vunpack.c.l.b16 %v513
        %v546 = vunpack.c.l.b16 %v514
        %v547 = vunpack.c.l.b16 %v515
        %v548 = vunpack.c.l.b16 %v516
        %v549 = vpack.c.b16 %v534, %v533
        %v550 = vpack.c.b16 %v536, %v535
        %v551 = vpack.c.b16 %v538, %v537
        %v552 = vpack.c.b16 %v540, %v539
        %v553 = vpack.c.b16 %v542, %v541
        %v554 = vpack.c.b16 %v544, %v543
        %v555 = vpack.c.b16 %v546, %v545
        %v556 = vpack.c.b16 %v548, %v547
        %565 = vmatpush.bf16.msra.mxu0 %v556
        %566 = vmatpush.bf16.msra.mxu0 %v555
        %567 = vmatpush.bf16.msra.mxu0 %v554
        %568 = vmatpush.bf16.msra.mxu0 %v553
        %569 = vmatpush.bf16.msra.mxu0 %v552
        %570 = vmatpush.bf16.msra.mxu0 %v551
        %571 = vmatpush.bf16.msra.mxu0 %v550
        %572 = vmatpush.bf16.msra.mxu0 %v549
        %573 = vmatmul.bf16.gmra.mxu0 %v500
        %v574 = vpop.f32.mrf.mxu0
        %v575 = vadd.f32 0.0, %v574
        %v576 = vpop.f32.mrf.mxu0
        %v577 = vadd.f32 0.0, %v576
        %578 = vdwg.mxu0
        %v579 = vadd.f32 %v498, %v575
        %v580 = vadd.f32 %v499, %v577
        %581 = vst [vmem:[#allocation2] sm:$0xff] %v579
        %582 = vst [vmem:[#allocation2 + $0x8] sm:$0xff] %v580
        %p583 = scmp.eq.s32.totalorder %s31, 1
        // Predicated region
        $region69: #{tpu_custom_call.1} parent=47 // pred_check
          %p584 = pneg %p583
        $region70: #{tpu_custom_call.1} parent=47 // pred_check_branch
          %586 = sbr.rel (%p584) target = $region72
        $region71: #{tpu_custom_call.1} parent=47 // pred_region
          %v587 = vld [vmem:[#allocation3] sm:$0xff]
          %v588 = vld [vmem:[#allocation3 + $0x8] sm:$0xff]
          %v589 = vld [vmem:[#allocation2] sm:$0xff]
          %v590 = vld [vmem:[#allocation2 + $0x8] sm:$0xff]
          %v591 = vadd.f32 %v587, %v589
          %v592 = vadd.f32 %v588, %v590
          %v593 = vld [vmem:[%s4] sm:$0x1]
          %v595 = vperm.slane %v593, 0
          %v597 = vadd.f32 %v591, %v595
          %v598 = vadd.f32 %v592, %v595
          %599 = vadd.xlane.f32.xlu0 %v597
          %v600 = vpop.xlane.xlu0 %599
          %601 = vadd.xlane.f32.xlu0 %v598
          %v602 = vpop.xlane.xlu0 %601
          %v603 = vrcp.pop 128.0
          %v604 = vmul.f32 128.0, %v603
          %v605 = vsub.f32 1.0, %v604
          %v606 = vmul.f32 %v603, %v605
          %v607 = vadd.f32 %v603, %v606
          %vm608 = vweird.f32 %v603
          %v609 = vsel %vm608, %v603, %v607
          %v610 = vmul.f32 %v600, %v609
          %v611 = vmul.f32 %v602, %v609
          %v612 = vsub.f32 %v597, %v610
          %v613 = vsub.f32 %v598, %v611
          %v614 = vmul.f32 %v612, %v612
          %v615 = vmul.f32 %v613, %v613
          %616 = vadd.xlane.f32.xlu0 %v614
          %v617 = vpop.xlane.xlu0 %616
          %618 = vadd.xlane.f32.xlu0 %v615
          %v619 = vpop.xlane.xlu0 %618
          %v620 = vmul.f32 %v617, %v609
          %v621 = vmul.f32 %v619, %v609
          %v622 = vadd.f32 %v620, 1e-05
          %v623 = vadd.f32 %v621, 1e-05
          %v624 = vrsqrt.pop %v622
          %v625 = vmul.f32 %v624, %v622
          %v626 = vmul.f32 %v625, %v624
          %v627 = vmul.f32 0.5, %v626
          %v628 = vsub.f32 1.5, %v627
          %v629 = vmul.f32 %v624, %v628
          %vm630 = vweird.f32 %v622
          %vm631 = vweird.f32 %v624
          %vm632 = vmor %vm630, %vm631
          %v633 = vsel %vm632, %v624, %v629
          %v634 = vrsqrt.pop %v623
          %v635 = vmul.f32 %v634, %v623
          %v636 = vmul.f32 %v635, %v634
          %v637 = vmul.f32 0.5, %v636
          %v638 = vsub.f32 1.5, %v637
          %v639 = vmul.f32 %v634, %v638
          %vm640 = vweird.f32 %v623
          %vm641 = vweird.f32 %v634
          %vm642 = vmor %vm640, %vm641
          %v643 = vsel %vm642, %v634, %v639
          %v644 = vmul.f32 %v612, %v633
          %v645 = vmul.f32 %v613, %v643
          %v646 = vld [vmem:[%s5] sm:$0x1]
          %v648 = vperm.slane %v646, 0
          %v650 = vmul.f32 %v644, %v648
          %v651 = vmul.f32 %v645, %v648
          %v652 = vld [vmem:[%s6] sm:$0x1]
          %v654 = vperm.slane %v652, 0
          %v656 = vadd.f32 %v650, %v654
          %v657 = vadd.f32 %v651, %v654
          %658 = vst [vmem:[#allocation11] sm:$0xff] %v656
          %659 = vst [vmem:[#allocation11 + $0x8] sm:$0xff] %v657
        $region72: #{tpu_custom_call.1} parent=47 // pred_fallthru
          _
        // Predicated region
        $region73: #{tpu_custom_call.1} parent=47 // pred_check
          %p660 = pneg %p223
        $region74: #{tpu_custom_call.1} parent=47 // pred_check_branch
          %662 = sbr.rel (%p660) target = $region76
        $region75: #{tpu_custom_call.1} parent=47 // pred_region
          %s663 = smul.u32 2, %s30
          %665 = vsyncadd [#allocation5], 0
          %s666 = smul.addr %s663, 8
          %s667 = scalar_lea.hbm %s7, %s666
          %s668 = sshll.u32 [#allocation11], 4
          %s669 = int_to_ptr.vmem [resolvable:$true] %s668
          %s670 = sshll.u32 %s667, 4
          %s671 = int_to_ptr.hbm [resolvable:$true] %s670
          %676 = dma.vmem_to_hbm [thread:$0]  %s669, 256, %s671, [#allocation5], 128, 128, 8
        $region76: #{tpu_custom_call.1} parent=47 // pred_fallthru
          _
        // Predicated region
        $region77: #{tpu_custom_call.1} parent=47 // pred_check
          %p677 = pneg %p223
        $region78: #{tpu_custom_call.1} parent=47 // pred_check_branch
          %679 = sbr.rel (%p677) target = $region80
        $region79: #{tpu_custom_call.1} parent=47 // pred_region
          %681 = dma.done [#allocation5], 256
        $region80: #{tpu_custom_call.1} parent=47 // pred_fallthru
          _
      $region48: #{tpu_custom_call.1} parent=5 // pred_fallthru
        _
      %p682 = scmp.le.s32.totalorder 2, %s21
      // Predicated region
      $region81: #{tpu_custom_call.1} parent=5 // pred_check
        %p683 = pneg %p682
      $region82: #{tpu_custom_call.1} parent=5 // pred_check_branch
        %685 = sbr.rel (%p683) target = $region84
      $region83: #{tpu_custom_call.1} parent=5 // pred_region
        %s686 = ssub.s32 %s21, 2
      $region84: #{tpu_custom_call.1} parent=5 // pred_fallthru
        _
    $region6: #{tpu_custom_call.1} parent=1 // loop_footer
      %s25 = sadd.s32 1, %s21
    $region7: #{tpu_custom_call.1} parent=1 // loop_footer_branch
      %20 = sbr.rel target = $region3
    $region8: #{tpu_custom_call.1} parent=1 // loop_exit
      _
    %687 = vsyncpa [#allocation4], 1
    %s688 = scalar_lea.sflag [#allocation4], 1
    %689 = vsyncpa %s688, 1
    %690 = vsyncpa [#allocation7], 1
    %s691 = scalar_lea.sflag [#allocation7], 1
    %692 = vsyncpa %s691, 1
    %693 = vsyncpa [#allocation10], 1
    %s694 = scalar_lea.sflag [#allocation10], 1
    %695 = vsyncpa %s694, 1
    %696 = vsyncpa [#allocation5], 1
    %s697 = scalar_lea.sflag [#allocation5], 1
    %698 = vsyncpa %s697, 1

</llo_original>
